<compile_context>
chip_gen: v5e
topology: v5e:2x2
jax: 0.10.0
libtpu: 0.0.40
codegen_flags: <defaults>
</compile_context>

<pallas_src>
import functools
import math

import jax
import jax.numpy as jnp
from jax.experimental import pallas as pl
from jax.experimental.pallas import tpu as pltpu


def _round_up(x, m):
    return ((x + m - 1) // m) * m


def _floordiv_small(x, d):
    """Exact floor(x / d) for int32 x in [0, 2**24) and Python int d >= 2."""
    q = jnp.floor(x.astype(jnp.float32) * jnp.float32(1.0 / d)).astype(jnp.int32)
    q = jnp.where(q * d > x, q - 1, q)
    q = jnp.where((q + 1) * d <= x, q + 1, q)
    return q


def _exact_floordiv(x, d, max_val):
    """Exact floor(x / d) for non-negative int32 x < max_val (< 2**31), Python int d >= 1.

    Avoids vector integer division entirely (shift for powers of two, f32
    estimate + correction for small operands, two-step long division or a
    bounded correction for huge flat indices).
    """
    if d == 1:
        return x
    if d & (d - 1) == 0:                         # power of two -> cheap shift
        return x >> (d.bit_length() - 1)
    if max_val <= (1 << 24):
        return _floordiv_small(x, d)
    if d >= 8192:
        # Quotient < 2**18, so the f32 estimate is off by at most 1; two-sided fix.
        q = jnp.floor(x.astype(jnp.float32) * jnp.float32(1.0 / d)).astype(jnp.int32)
        q = jnp.where(q * d > x, q - 1, q)
        q = jnp.where(q * d > x, q - 1, q)
        q = jnp.where((q + 1) * d <= x, q + 1, q)
        q = jnp.where((q + 1) * d <= x, q + 1, q)
        return q
    # Two-step long division in base 2**10: both partial dividends are < 2**24.
    hi = x >> 10                                 # < 2**21 for x < 2**31
    lo = x & 1023
    q_hi = _floordiv_small(hi, d)
    r_hi = hi - q_hi * d                         # < d < 8192
    return q_hi * 1024 + _floordiv_small(r_hi * 1024 + lo, d)


def _vmem_capacity_bytes():
    """Physical VMEM per TensorCore; conservative 64 MiB (v7x-sized) fallback."""
    try:
        info = pltpu.get_tpu_info()
        for attr in ("vmem_capacity_bytes", "vmem_size_bytes", "vmem_bytes"):
            val = getattr(info, attr, None)
            if val:
                return int(val)
    except Exception:
        pass
    return 64 * 1024 * 1024


def _spatial_mean_kernel(x_ref, out_ref, acc_ref, *, ndim, strides, n_total,
                         tn, nc, eps_total, mode):
    """grid = (row tiles [parallel], spatial tiles [arbitrary / reduction])."""
    k = pl.program_id(1)
    nk = pl.num_programs(1)

    @pl.when(k == 0)
    def _init():
        acc_ref[...] = jnp.zeros_like(acc_ref)

    # ---- (nc, tn) coefficient tile, generated on-chip from the tile offset ----
    #   rows [0, ndim): spatial coordinates in pytorch_order (reversed axes)
    #   row  ndim     : ones (denominator);  remaining rows: zero padding.
    lane = jax.lax.broadcasted_iota(jnp.int32, (1, tn), 1)
    flat = lane + k * tn                                            # (1, tn)
    row = jax.lax.broadcasted_iota(jnp.int32, (nc, tn), 0)
    coefs = jnp.where(row == ndim, jnp.float32(1), jnp.float32(0))  # (nc, tn)
    rem = flat
    max_val = n_total + tn
    for i in range(ndim):                                           # static unroll
        if i < ndim - 1:
            q = _exact_floordiv(rem, strides[i], max_val)
            rem = rem - q * strides[i]
            max_val = strides[i]
        else:
            q = rem                                                 # last axis: stride 1
        coefs = jnp.where(row == (ndim - 1 - i), q.astype(jnp.float32), coefs)
    # NOTE: rhs is contracted on its lane dim (A @ B.T form); if the Mosaic
    # lowering ever shows an XLU transpose on the critical path, switch to a
    # streamed (tn, nc) coordinate table instead (~1.6% extra HBM for large M).
    coefs = coefs.astype(jnp.float32 if mode == "f32_highest" else jnp.bfloat16)

    def _accumulate(mask_tail):
        xv = x_ref[...]
        if mode == "bf16":
            ax = jnp.abs(xv)                                        # no upcast at all
            if mask_tail:
                ax = jnp.where(flat < n_total, ax, 0.0).astype(ax.dtype)
            acc_ref[...] += jax.lax.dot_general(
                ax, coefs, (((1,), (1,)), ((), ())),
                preferred_element_type=jnp.float32)
        elif mode == "split":
            # f32 |x| split into bf16 hi/lo -> two bf16 MXU passes, f32 accumulate.
            ax = jnp.abs(xv.astype(jnp.float32))
            if mask_tail:
                ax = jnp.where(flat < n_total, ax, 0.0)
            hi = ax.astype(jnp.bfloat16)
            lo = (ax - hi.astype(jnp.float32)).astype(jnp.bfloat16)
            acc_ref[...] += (
                jax.lax.dot_general(hi, coefs, (((1,), (1,)), ((), ())),
                                    preferred_element_type=jnp.float32)
                + jax.lax.dot_general(lo, coefs, (((1,), (1,)), ((), ())),
                                      preferred_element_type=jnp.float32))
        else:  # "f32_highest": accurate fallback when coords are not bf16-exact
            ax = jnp.abs(xv.astype(jnp.float32))
            if mask_tail:
                ax = jnp.where(flat < n_total, ax, 0.0)
            acc_ref[...] += jax.lax.dot_general(
                ax, coefs, (((1,), (1,)), ((), ())),
                preferred_element_type=jnp.float32,
                precision=jax.lax.Precision.HIGHEST)

    if n_total % tn != 0:
        # Full tiles run select-free; only the final ragged tile masks (and thereby
        # sanitizes any NaN/Inf garbage in) the out-of-range lanes.
        @pl.when(k < nk - 1)
        def _full():
            _accumulate(False)

        @pl.when(k == nk - 1)
        def _tail():
            _accumulate(True)
    else:
        _accumulate(False)

    @pl.when(k == nk - 1)
    def _finalize():
        acc = acc_ref[...]
        num = acc[:, :ndim]                                         # (tm, ndim)
        den = acc[:, ndim:ndim + 1] + eps_total                     # (tm, 1)
        out_ref[...] = (num / den).astype(out_ref.dtype)


def spatial_mean_chan(x, eps=1e-8, tm=None, tn=None):
    """Pallas TPU implementation of SpatialMean_CHAN.forward
    (pytorch_order=True, return_power=False).  x: [B, C, *spatial] -> [B, C, ndim]."""
    # TODO(synk): return_power=True and pytorch_order=False variants are not wired up.
    B, C = int(x.shape[0]), int(x.shape[1])
    spatial = tuple(int(s) for s in x.shape[2:])
    ndim = len(spatial)
    assert ndim >= 1, "SpatialMean_CHAN needs at least one spatial dimension"
    N = math.prod(spatial)
    M = B * C
    strides = tuple(math.prod(spatial[i + 1:]) for i in range(ndim))
    nc = _round_up(ndim + 1, 8)            # coordinate rows + ones row, sublane aligned

    itemsize = int(x.dtype.itemsize)
    sublane = max(8, 32 // itemsize)       # dtype-aware sublane multiple (f32 8 / bf16 16)

    # Precision mode: coordinates <= 256 are bf16-exact, so the MXU can run in bf16.
    if max(spatial) <= 256:
        mode = "bf16" if x.dtype == jnp.bfloat16 else "split"
    else:
        mode = "f32_highest"               # TODO(synk): hi/lo coefficient split instead

    xf = x.reshape(M, N)                   # contiguous reshape; no pad, no copy

    # ---- generation-aware VMEM budget (128 MiB on v5e/v6e, 64 MiB on v7x) ----
    vmem_phys = _vmem_capacity_bytes()
    vmem_limit = int(min(96 * 1024 * 1024, (vmem_phys * 3) // 4))
    budget = vmem_limit // 2               # headroom for compiler temps / coefs / output

    # ---- row tile (parallel axis); keep >= 2 tiles so both v7x cores get work ----
    if tm is None:
        tm = 512
    tm = max(sublane, min(_round_up(M, sublane), _round_up(tm, sublane)))
    if M >= 2 * sublane:
        tm = min(tm, _round_up(pl.cdiv(M, 2), sublane))
    gm = pl.cdiv(M, tm)

    # ---- lane tile: as big as the budget allows (amortizes ~0.35 us/step overhead) ----
    per_elem = {"bf16": 2 * itemsize + 2,        # double-buffered input + |x| temp
                "split": 2 * itemsize + 8,       # + f32 |x| + bf16 hi/lo temps
                "f32_highest": 2 * itemsize + 4}[mode]
    if tn is None:
        tn = budget // (tm * per_elem)
    tn = int(max(128, min((int(tn) // 128) * 128, _round_up(N, 128))))
    nk = pl.cdiv(N, tn)

    kernel = functools.partial(
        _spatial_mean_kernel, ndim=ndim, strides=strides, n_total=N,
        tn=tn, nc=nc, eps_total=float(eps) * float(N), mode=mode)

    npasses = {"bf16": 1, "split": 2, "f32_highest": 6}[mode]
    cost = pl.CostEstimate(
        flops=2 * M * N * (ndim + 1) * npasses,
        transcendentals=0,
        bytes_accessed=M * N * itemsize + M * ndim * 4)

    out_padded = pl.pallas_call(
        kernel,
        out_shape=jax.ShapeDtypeStruct((gm * tm, ndim), jnp.float32),
        grid_spec=pltpu.PrefetchScalarGridSpec(
            num_scalar_prefetch=0,
            grid=(gm, nk),                                       # reduction axis last
            in_specs=[pl.BlockSpec((tm, tn), lambda i, k: (i, k))],
            out_specs=pl.BlockSpec((tm, ndim), lambda i, k: (i, 0)),
            scratch_shapes=[pltpu.VMEM((tm, nc), jnp.float32)],  # fused num+den acc
        ),
        compiler_params=pltpu.CompilerParams(
            dimension_semantics=("parallel", "arbitrary"),
            vmem_limit_bytes=vmem_limit,
        ),
        cost_estimate=cost,
    )(xf)

    # Rows beyond M belong to the padded row tile (undefined); slice them off.
    return out_padded[:M].reshape(B, C, ndim).astype(x.dtype)


def spatial_mean_chan_reference(x, eps=1e-8):
    """Pure-JAX reference mirroring the PyTorch forward exactly."""
    B, C = x.shape[0], x.shape[1]
    spatial = tuple(int(s) for s in x.shape[2:])
    N = math.prod(spatial)
    grids = jnp.meshgrid(*[jnp.arange(s, dtype=jnp.float32) for s in spatial],
                         indexing="ij")
    coords = jnp.stack([g.reshape(-1) for g in reversed(grids)], axis=0)  # [ndim, N]
    ax = jnp.abs(x.reshape(B, C, N).astype(jnp.float32))
    numerator = jnp.einsum("bcn,dn->bcd", ax, coords,
                           precision=jax.lax.Precision.HIGHEST)
    denominator = jnp.sum(ax + eps, axis=-1, keepdims=True)
    return numerator / denominator


if __name__ == "__main__":
    # Input [B, C, H, W, D] as in the module docstring; output [B, C, 3].
    B, C, H, W, D = 2, 4, 8, 8, 8
    key = jax.random.PRNGKey(0)
    x = jax.random.normal(key, (B, C, H, W, D), dtype=jnp.float32)

    out = jax.block_until_ready(spatial_mean_chan(x))
    ref = spatial_mean_chan_reference(x)
    assert out.shape == (B, C, 3), out.shape
    err = float(jnp.max(jnp.abs(out - ref)))
    assert err < 2e-3, f"max abs err {err}"

    # Non-power-of-two / ragged shapes exercise the final-tile lane masking, the
    # exact constant-division coordinate path, and padded output rows (M=6).
    x2 = jax.random.normal(jax.random.PRNGKey(1), (2, 3, 6, 10, 12), dtype=jnp.float32)
    out2 = jax.block_until_ready(spatial_mean_chan(x2))
    ref2 = spatial_mean_chan_reference(x2)
    assert out2.shape == (2, 3, 3), out2.shape
    err2 = float(jnp.max(jnp.abs(out2 - ref2)))
    assert err2 < 2e-3, f"max abs err {err2}"

    # bf16 input exercises the single-pass, no-upcast MXU path (output rounded to bf16).
    x3 = jax.random.normal(jax.random.PRNGKey(2), (2, 4, 16, 16), dtype=jnp.bfloat16)
    out3 = jax.block_until_ready(spatial_mean_chan(x3))
    ref3 = spatial_mean_chan_reference(x3)
    assert out3.shape == (2, 4, 2), out3.shape
    err3 = float(jnp.max(jnp.abs(out3.astype(jnp.float32) - ref3)))
    assert err3 < 6e-2, f"max abs err {err3}"

    print("KERNEL_OK")
</pallas_src>

<mosaic_0001>
module attributes {stable_mosaic.version = 11 : i64} {
  func.func @_spatial_mean_kernel(%arg0: i32, %arg1: i32, %arg2: memref<8x512xf32, #tpu.memory_space<vmem>>, %arg3: memref<8x3xf32, #tpu.memory_space<vmem>>, %arg4: memref<8x8xf32, #tpu.memory_space<vmem>>) attributes {dimension_semantics = [#tpu.dimension_semantics<parallel>, #tpu.dimension_semantics<arbitrary>], iteration_bounds = array<i64: 1, 1>, scalar_prefetch = 0 : i64, scratch_operands = 1 : i64, tpu.core_type = #tpu.core_type<tc>, window_params = [{transform_indices = @transform_0, window_bounds = array<i64: 8, 512>}, {transform_indices = @transform_1, window_bounds = array<i64: 8, 3>}]} {
    %c0_i32 = arith.constant 0 : i32
    %0 = arith.cmpi eq, %arg1, %c0_i32 : i32
    %1 = arith.extui %0 : i1 to i32
    %c0_i32_0 = arith.constant 0 : i32
    %2 = arith.cmpi ne, %1, %c0_i32_0 : i32
    scf.if %2 {
      %cst_13 = arith.constant 0.000000e+00 : f32
      %57 = vector.broadcast %cst_13 : f32 to vector<8x8xf32>
      %c0_14 = arith.constant 0 : index
      %c0_15 = arith.constant 0 : index
      %58 = vector.load %arg4[%c0_14, %c0_15] : memref<8x8xf32, #tpu.memory_space<vmem>>, vector<8x8xf32>
      tpu.vector_store %arg4[%c0_14, %c0_15], %57 {strides = array<i32>} : memref<8x8xf32, #tpu.memory_space<vmem>>, vector<8x8xf32>,
    } else {
    }
    %3 = tpu.iota {dimensions = array<i32: 1>} : vector<1x512xi32>
    %c512_i32 = arith.constant 512 : i32
    %4 = arith.muli %arg1, %c512_i32 : i32
    %5 = vector.broadcast %4 : i32 to vector<1x512xi32>
    %6 = arith.addi %3, %5 : vector<1x512xi32>
    %7 = tpu.iota {dimensions = array<i32: 0>} : vector<8x512xi32>
    %c3_i32 = arith.constant 3 : i32
    %8 = vector.broadcast %c3_i32 : i32 to vector<8x512xi32>
    %9 = arith.cmpi eq, %7, %8 : vector<8x512xi32>
    %cst = arith.constant 1.000000e+00 : f32
    %cst_1 = arith.constant 0.000000e+00 : f32
    %10 = vector.broadcast %cst : f32 to vector<8x512xf32>
    %11 = vector.broadcast %cst_1 : f32 to vector<8x512xf32>
    %12 = arith.select %9, %10, %11 : vector<8x512xi1>, vector<8x512xf32>
    %c6_i32 = arith.constant 6 : i32
    %13 = vector.broadcast %c6_i32 : i32 to vector<1x512xi32>
    %14 = arith.shrsi %6, %13 : vector<1x512xi32>
    %c64_i32 = arith.constant 64 : i32
    %15 = vector.broadcast %c64_i32 : i32 to vector<1x512xi32>
    %16 = arith.muli %14, %15 : vector<1x512xi32>
    %17 = arith.subi %6, %16 : vector<1x512xi32>
    %c2_i32 = arith.constant 2 : i32
    %18 = vector.broadcast %c2_i32 : i32 to vector<8x512xi32>
    %19 = arith.cmpi eq, %7, %18 : vector<8x512xi32>
    %20 = arith.sitofp %14 : vector<1x512xi32> to vector<1x512xf32>
    %21 = vector.shape_cast %20 : vector<1x512xf32> to vector<1x512xf32>
    %22 = vector.broadcast %21 : vector<1x512xf32> to vector<8x512xf32>
    %23 = arith.select %19, %22, %12 : vector<8x512xi1>, vector<8x512xf32>
    %c3_i32_2 = arith.constant 3 : i32
    %24 = vector.broadcast %c3_i32_2 : i32 to vector<1x512xi32>
    %25 = arith.shrsi %17, %24 : vector<1x512xi32>
    %c8_i32 = arith.constant 8 : i32
    %26 = vector.broadcast %c8_i32 : i32 to vector<1x512xi32>
    %27 = arith.muli %25, %26 : vector<1x512xi32>
    %28 = arith.subi %17, %27 : vector<1x512xi32>
    %c1_i32 = arith.constant 1 : i32
    %29 = vector.broadcast %c1_i32 : i32 to vector<8x512xi32>
    %30 = arith.cmpi eq, %7, %29 : vector<8x512xi32>
    %31 = arith.sitofp %25 : vector<1x512xi32> to vector<1x512xf32>
    %32 = vector.shape_cast %31 : vector<1x512xf32> to vector<1x512xf32>
    %33 = vector.broadcast %32 : vector<1x512xf32> to vector<8x512xf32>
    %34 = arith.select %30, %33, %23 : vector<8x512xi1>, vector<8x512xf32>
    %c0_i32_3 = arith.constant 0 : i32
    %35 = vector.broadcast %c0_i32_3 : i32 to vector<8x512xi32>
    %36 = arith.cmpi eq, %7, %35 : vector<8x512xi32>
    %37 = arith.sitofp %28 : vector<1x512xi32> to vector<1x512xf32>
    %38 = vector.shape_cast %37 : vector<1x512xf32> to vector<1x512xf32>
    %39 = vector.broadcast %38 : vector<1x512xf32> to vector<8x512xf32>
    %40 = arith.select %36, %39, %34 : vector<8x512xi1>, vector<8x512xf32>
    %41 = arith.truncf %40 : vector<8x512xf32> to vector<8x512xbf16>
    %c0 = arith.constant 0 : index
    %c0_4 = arith.constant 0 : index
    %42 = vector.load %arg2[%c0, %c0_4] : memref<8x512xf32, #tpu.memory_space<vmem>>, vector<8x512xf32>
    %43 = math.absf %42 : vector<8x512xf32>
    %44 = arith.truncf %43 : vector<8x512xf32> to vector<8x512xbf16>
    %45 = arith.extf %44 : vector<8x512xbf16> to vector<8x512xf32>
    %46 = arith.subf %43, %45 : vector<8x512xf32>
    %47 = arith.truncf %46 : vector<8x512xf32> to vector<8x512xbf16>
    %c0_5 = arith.constant 0 : index
    %c0_6 = arith.constant 0 : index
    %48 = vector.load %arg4[%c0_5, %c0_6] : memref<8x8xf32, #tpu.memory_space<vmem>>, vector<8x8xf32>
    %cst_7 = arith.constant dense<0.000000e+00> : vector<8x8xf32>
    %49 = tpu.matmul %44, %41, %cst_7 {dimension_numbers = #tpu.dot_dimension_numbers<[1], [1], [0], [0], [0, 0, 1, 0], [], []>} : vector<8x512xbf16>, vector<8x512xbf16>, vector<8x8xf32> -> vector<8x8xf32>
    %cst_8 = arith.constant dense<0.000000e+00> : vector<8x8xf32>
    %50 = tpu.matmul %47, %41, %cst_8 {dimension_numbers = #tpu.dot_dimension_numbers<[1], [1], [0], [0], [0, 0, 1, 0], [], []>} : vector<8x512xbf16>, vector<8x512xbf16>, vector<8x8xf32> -> vector<8x8xf32>
    %51 = arith.addf %49, %50 : vector<8x8xf32>
    %52 = arith.addf %48, %51 : vector<8x8xf32>
    %c0_9 = arith.constant 0 : index
    %c0_10 = arith.constant 0 : index
    %53 = vector.load %arg4[%c0_9, %c0_10] : memref<8x8xf32, #tpu.memory_space<vmem>>, vector<8x8xf32>
    tpu.vector_store %arg4[%c0_9, %c0_10], %52 {strides = array<i32>} : memref<8x8xf32, #tpu.memory_space<vmem>>, vector<8x8xf32>,
    %c0_i32_11 = arith.constant 0 : i32
    %54 = arith.cmpi eq, %arg1, %c0_i32_11 : i32
    %55 = arith.extui %54 : i1 to i32
    %c0_i32_12 = arith.constant 0 : i32
    %56 = arith.cmpi ne, %55, %c0_i32_12 : i32
    scf.if %56 {
      %c0_13 = arith.constant 0 : index
      %c0_14 = arith.constant 0 : index
      %57 = vector.load %arg4[%c0_13, %c0_14] : memref<8x8xf32, #tpu.memory_space<vmem>>, vector<8x8xf32>
      %58 = vector.extract_strided_slice %57 {offsets = [0, 0], sizes = [8, 3], strides = [1, 1]} : vector<8x8xf32> to vector<8x3xf32>
      %59 = vector.extract_strided_slice %57 {offsets = [0, 3], sizes = [8, 1], strides = [1, 1]} : vector<8x8xf32> to vector<8x1xf32>
      %cst_15 = arith.constant 5.120000e-06 : f32
      %60 = vector.broadcast %cst_15 : f32 to vector<8x1xf32>
      %61 = arith.addf %59, %60 : vector<8x1xf32>
      %62 = vector.broadcast %61 : vector<8x1xf32> to vector<8x3xf32>
      %63 = arith.divf %58, %62 : vector<8x3xf32>
      %c0_16 = arith.constant 0 : index
      %c0_17 = arith.constant 0 : index
      %64 = vector.load %arg3[%c0_16, %c0_17] : memref<8x3xf32, #tpu.memory_space<vmem>>, vector<8x3xf32>
      tpu.vector_store %arg3[%c0_16, %c0_17], %63 {strides = array<i32>} : memref<8x3xf32, #tpu.memory_space<vmem>>, vector<8x3xf32>,
    } else {
    }
    return
  }
  func.func @transform_0(%arg0: i32, %arg1: i32) -> (i32, i32) {
    %c0_i32 = arith.constant 0 : i32
    return %arg0, %arg1 : i32, i32
  }
  func.func @transform_1(%arg0: i32, %arg1: i32) -> (i32, i32) {
    %c0_i32 = arith.constant 0 : i32
    %c0_i32_0 = arith.constant 0 : i32
    return %arg0, %c0_i32 : i32, i32
  }
}

</mosaic_0001>

<llo_original>
// kernel: tpu_custom_call.1
$region0: #{tpu_custom_call.1}
  #allocation0 [shape = 'u32[]', space=smem, size = 0x4, offset = 0x4, fixed_abs, tag = 'smem constant byte address 0x4 - core index']
  #allocation1 [shape = 'u32[72,128]{1,0:T(1,128)}', space=vmem, size = 0x9000, scoped, tag = 'internal scratch']
  #allocation2 [shape = 'f32[8,8]{1,0:T(8,128)}', space=vmem, size = 0x1000, scoped, tag = 'scratch operand']
  %s0 = inlined_call_operand.hbm [shape: f32[8,512], index: 0, kind: input, shape index: {}]
  %s1 = inlined_call_operand.vmem [shape: f32[8,3], index: 1, kind: output, shape index: {}]
  %s2 = sld [smem:[#allocation0]]
  $region26: #{tpu_custom_call.1} parent=0
    _
  %s4 = ssub.s32 1, %s2
  %s5 = scalar_select 0, %s4, %s2
  $region1: #{tpu_custom_call.1} parent=0
    #allocation3 [shape = 'u8[16384]{0}', space=vmem, size = 0x4000, scoped, tag = 'input window, operand 0, single buffered']
    #allocation4 [shape = 's32[1]{0}', space=sflag, size = 0x4, scoped, tag = 'scoped memory for tpu_custom_call.1']
    %6 = vsyncpa [#allocation4], 0
    // Predicated region
    $region2: #{tpu_custom_call.1} parent=1 // pred_check
      _
    $region3: #{tpu_custom_call.1} parent=1 // pred_check_branch
      %8 = sbr.rel (0) target = $region5
    $region4: #{tpu_custom_call.1} parent=1 // pred_region
      %10 = vsyncadd [#allocation4], 0
      %s12 = sshll.u32 %s0, 4
      %s13 = int_to_ptr.hbm [resolvable:$true] %s12
      %s14 = sshll.u32 [#allocation3], 4
      %s15 = int_to_ptr.vmem [resolvable:$true] %s14
      %17 = dma.hbm_to_vmem [thread:$0]  %s13, 512, %s15, [#allocation4]
    $region5: #{tpu_custom_call.1} parent=1 // pred_fallthru
      _
    // Predicated region
    $region6: #{tpu_custom_call.1} parent=1 // pred_check
      _
    $region7: #{tpu_custom_call.1} parent=1 // pred_check_branch
      %19 = sbr.rel (0) target = $region9
    $region8: #{tpu_custom_call.1} parent=1 // pred_region
      %21 = dma.done [#allocation4], 512
    $region9: #{tpu_custom_call.1} parent=1 // pred_fallthru
      _
    %p23 = scmp.eq.s32.totalorder 0, 0
    // Predicated region
    $region10: #{tpu_custom_call.1} parent=1 // pred_check
      %p24 = pneg %p23
    $region11: #{tpu_custom_call.1} parent=1 // pred_check_branch
      %26 = sbr.rel (%p24) target = $region13
    $region12: #{tpu_custom_call.1} parent=1 // pred_region
      %vm27 = vcmask 64512
      %28 = vst.msk [vmem:[#allocation2] sm:$0xff] %vm27, 0.0
    $region13: #{tpu_custom_call.1} parent=1 // pred_fallthru
      _
    %v29 = vlaneseq
    %v30 = vand.u32 %v29, 127
    %v31 = vadd.s32 %v30, 128
    %v32 = vadd.s32 %v30, 256
    %v33 = vadd.s32 %v30, 384
    %s34 = smul.u32 0, 512
    %v35 = vstv %s34
    %v36 = vadd.s32 %v30, %v35
    %v37 = vadd.s32 %v31, %v35
    %v38 = vadd.s32 %v32, %v35
    %v39 = vadd.s32 %v33, %v35
    %v40 = vlaneseq
    %v41 = vshrl.u32 %v40, 7
    %vm42 = vcmp.eq.s32.totalorder %v41, 3
    %v43 = vsel %vm42, 1.0, 0.0
    %v44 = vshra.s32 %v36, 6
    %v45 = vshra.s32 %v37, 6
    %v46 = vshra.s32 %v38, 6
    %v47 = vshra.s32 %v39, 6
    %v48 = vmul.u32 %v44, 64
    %v49 = vmul.u32 %v45, 64
    %v50 = vmul.u32 %v46, 64
    %v51 = vmul.u32 %v47, 64
    %v52 = vsub.s32 %v36, %v48
    %v53 = vsub.s32 %v37, %v49
    %v54 = vsub.s32 %v38, %v50
    %v55 = vsub.s32 %v39, %v51
    %vm56 = vcmp.eq.s32.totalorder %v41, 2
    %v57 = vcvt.s32.f32 %v44
    %v58 = vcvt.s32.f32 %v45
    %v59 = vcvt.s32.f32 %v46
    %v60 = vcvt.s32.f32 %v47
    %v61 = vsel %vm56, %v57, %v43
    %v62 = vsel %vm56, %v58, %v43
    %v63 = vsel %vm56, %v59, %v43
    %v64 = vsel %vm56, %v60, %v43
    %v65 = vshra.s32 %v52, 3
    %v66 = vshra.s32 %v53, 3
    %v67 = vshra.s32 %v54, 3
    %v68 = vshra.s32 %v55, 3
    %v69 = vmul.u32 %v65, 8
    %v70 = vmul.u32 %v66, 8
    %v71 = vmul.u32 %v67, 8
    %v72 = vmul.u32 %v68, 8
    %v73 = vsub.s32 %v52, %v69
    %v74 = vsub.s32 %v53, %v70
    %v75 = vsub.s32 %v54, %v71
    %v76 = vsub.s32 %v55, %v72
    %vm77 = vcmp.eq.s32.totalorder %v41, 1
    %v78 = vcvt.s32.f32 %v65
    %v79 = vcvt.s32.f32 %v66
    %v80 = vcvt.s32.f32 %v67
    %v81 = vcvt.s32.f32 %v68
    %v82 = vsel %vm77, %v78, %v61
    %v83 = vsel %vm77, %v79, %v62
    %v84 = vsel %vm77, %v80, %v63
    %v85 = vsel %vm77, %v81, %v64
    %vm86 = vcmp.eq.s32.totalorder %v41, 0
    %v87 = vcvt.s32.f32 %v73
    %v88 = vcvt.s32.f32 %v74
    %v89 = vcvt.s32.f32 %v75
    %v90 = vcvt.s32.f32 %v76
    %v91 = vsel %vm86, %v87, %v82
    %v92 = vsel %vm86, %v88, %v83
    %v93 = vsel %vm86, %v89, %v84
    %v94 = vsel %vm86, %v90, %v85
    %v95 = vpack.c.bf16 %v91, %v91
    %v96 = vpack.c.bf16 %v92, %v92
    %v97 = vpack.c.bf16 %v93, %v93
    %v98 = vpack.c.bf16 %v94, %v94
    %v99 = vld [vmem:[#allocation3] sm:$0xff]
    %v100 = vld [vmem:[#allocation3 + $0x8] sm:$0xff]
    %v101 = vld [vmem:[#allocation3 + $0x10] sm:$0xff]
    %v102 = vld [vmem:[#allocation3 + $0x18] sm:$0xff]
    %v103 = vand.u32 2147483647, %v99
    %v104 = vand.u32 2147483647, %v100
    %v105 = vand.u32 2147483647, %v101
    %v106 = vand.u32 2147483647, %v102
    %v107 = vpack.c.bf16 %v104, %v103
    %v108 = vpack.c.bf16 %v106, %v105
    %v109 = vunpack.c.l.bf16 %v107
    %v110 = vunpack.c.h.bf16 %v107
    %v111 = vunpack.c.l.bf16 %v108
    %v112 = vunpack.c.h.bf16 %v108
    %v113 = vsub.f32 %v103, %v109
    %v114 = vsub.f32 %v104, %v110
    %v115 = vsub.f32 %v105, %v111
    %v116 = vsub.f32 %v106, %v112
    %v117 = vpack.c.bf16 %v113, %v113
    %v118 = vpack.c.bf16 %v114, %v114
    %v119 = vpack.c.bf16 %v115, %v115
    %v120 = vpack.c.bf16 %v116, %v116
    %v121 = vld [vmem:[#allocation2] sm:$0xff]
    %122 = vmatpush.bf16.xpose.msra.mxu0 0
    %123 = vmatpush.bf16.xpose.msra.mxu0 0
    %124 = vmatpush.bf16.xpose.msra.mxu0 0
    %125 = vmatpush.bf16.xpose.msra.mxu0 0
    %126 = vmatpush.bf16.xpose.msra.mxu0 0
    %127 = vmatpush.bf16.xpose.msra.mxu0 0
    %128 = vmatpush.bf16.xpose.msra.mxu0 0
    %129 = vmatpush.bf16.xpose.msra.mxu0 %v95
    %130 = vmatmul.bf16.gmra.mxu0 %v117
    %v131 = vpop.f32.mrf.mxu0
    %v132 = vadd.f32 0.0, %v131
    %v133 = vpop.f32.mrf.mxu0
    %134 = vdwg.mxu0
    %135 = vmatpush.bf16.xpose.msra.mxu0 0
    %136 = vmatpush.bf16.xpose.msra.mxu0 0
    %137 = vmatpush.bf16.xpose.msra.mxu0 0
    %138 = vmatpush.bf16.xpose.msra.mxu0 0
    %139 = vmatpush.bf16.xpose.msra.mxu0 0
    %140 = vmatpush.bf16.xpose.msra.mxu0 0
    %141 = vmatpush.bf16.xpose.msra.mxu0 0
    %142 = vmatpush.bf16.xpose.msra.mxu0 %v96
    %143 = vmatmul.bf16.gmra.mxu0 %v118
    %v144 = vpop.f32.mrf.mxu0
    %v145 = vadd.f32 %v132, %v144
    %v146 = vpop.f32.mrf.mxu0
    %147 = vdwg.mxu0
    %148 = vmatpush.bf16.xpose.msra.mxu0 0
    %149 = vmatpush.bf16.xpose.msra.mxu0 0
    %150 = vmatpush.bf16.xpose.msra.mxu0 0
    %151 = vmatpush.bf16.xpose.msra.mxu0 0
    %152 = vmatpush.bf16.xpose.msra.mxu0 0
    %153 = vmatpush.bf16.xpose.msra.mxu0 0
    %154 = vmatpush.bf16.xpose.msra.mxu0 0
    %155 = vmatpush.bf16.xpose.msra.mxu0 %v97
    %156 = vmatmul.bf16.gmra.mxu0 %v119
    %v157 = vpop.f32.mrf.mxu0
    %v158 = vadd.f32 %v145, %v157
    %v159 = vpop.f32.mrf.mxu0
    %160 = vdwg.mxu0
    %161 = vmatpush.bf16.xpose.msra.mxu0 0
    %162 = vmatpush.bf16.xpose.msra.mxu0 0
    %163 = vmatpush.bf16.xpose.msra.mxu0 0
    %164 = vmatpush.bf16.xpose.msra.mxu0 0
    %165 = vmatpush.bf16.xpose.msra.mxu0 0
    %166 = vmatpush.bf16.xpose.msra.mxu0 0
    %167 = vmatpush.bf16.xpose.msra.mxu0 0
    %168 = vmatpush.bf16.xpose.msra.mxu0 %v98
    %169 = vmatmul.bf16.gmra.mxu0 %v120
    %v170 = vpop.f32.mrf.mxu0
    %v171 = vadd.f32 %v158, %v170
    %v172 = vpop.f32.mrf.mxu0
    %173 = vdwg.mxu0
    %v176 = vunpack.c.l.b16 %v107
    %v177 = vunpack.c.h.b16 %v107
    %v178 = vunpack.c.l.b16 %v108
    %v179 = vunpack.c.h.b16 %v108
    %v180 = vpack.c.b16 %v176, %v176
    %v181 = vpack.c.b16 %v177, %v177
    %v182 = vpack.c.b16 %v178, %v178
    %v183 = vpack.c.b16 %v179, %v179
    %188 = vmatpush.bf16.xpose.msra.mxu0 0
    %189 = vmatpush.bf16.xpose.msra.mxu0 0
    %190 = vmatpush.bf16.xpose.msra.mxu0 0
    %191 = vmatpush.bf16.xpose.msra.mxu0 0
    %192 = vmatpush.bf16.xpose.msra.mxu0 0
    %193 = vmatpush.bf16.xpose.msra.mxu0 0
    %194 = vmatpush.bf16.xpose.msra.mxu0 0
    %195 = vmatpush.bf16.xpose.msra.mxu0 %v95
    %196 = vmatmul.bf16.gmra.mxu0 %v180
    %v197 = vpop.f32.mrf.mxu0
    %v198 = vadd.f32 %v171, %v197
    %v199 = vpop.f32.mrf.mxu0
    %200 = vdwg.mxu0
    %201 = vmatpush.bf16.xpose.msra.mxu0 0
    %202 = vmatpush.bf16.xpose.msra.mxu0 0
    %203 = vmatpush.bf16.xpose.msra.mxu0 0
    %204 = vmatpush.bf16.xpose.msra.mxu0 0
    %205 = vmatpush.bf16.xpose.msra.mxu0 0
    %206 = vmatpush.bf16.xpose.msra.mxu0 0
    %207 = vmatpush.bf16.xpose.msra.mxu0 0
    %208 = vmatpush.bf16.xpose.msra.mxu0 %v96
    %209 = vmatmul.bf16.gmra.mxu0 %v181
    %v210 = vpop.f32.mrf.mxu0
    %v211 = vadd.f32 %v198, %v210
    %v212 = vpop.f32.mrf.mxu0
    %213 = vdwg.mxu0
    %214 = vmatpush.bf16.xpose.msra.mxu0 0
    %215 = vmatpush.bf16.xpose.msra.mxu0 0
    %216 = vmatpush.bf16.xpose.msra.mxu0 0
    %217 = vmatpush.bf16.xpose.msra.mxu0 0
    %218 = vmatpush.bf16.xpose.msra.mxu0 0
    %219 = vmatpush.bf16.xpose.msra.mxu0 0
    %220 = vmatpush.bf16.xpose.msra.mxu0 0
    %221 = vmatpush.bf16.xpose.msra.mxu0 %v97
    %222 = vmatmul.bf16.gmra.mxu0 %v182
    %v223 = vpop.f32.mrf.mxu0
    %v224 = vadd.f32 %v211, %v223
    %v225 = vpop.f32.mrf.mxu0
    %226 = vdwg.mxu0
    %227 = vmatpush.bf16.xpose.msra.mxu0 0
    %228 = vmatpush.bf16.xpose.msra.mxu0 0
    %229 = vmatpush.bf16.xpose.msra.mxu0 0
    %230 = vmatpush.bf16.xpose.msra.mxu0 0
    %231 = vmatpush.bf16.xpose.msra.mxu0 0
    %232 = vmatpush.bf16.xpose.msra.mxu0 0
    %233 = vmatpush.bf16.xpose.msra.mxu0 0
    %234 = vmatpush.bf16.xpose.msra.mxu0 %v98
    %235 = vmatmul.bf16.gmra.mxu0 %v183
    %v236 = vpop.f32.mrf.mxu0
    %v237 = vadd.f32 %v224, %v236
    %v238 = vpop.f32.mrf.mxu0
    %239 = vdwg.mxu0
    %v240 = vadd.f32 %v121, %v237
    %vm241 = vcmask 64512
    %242 = vst.msk [vmem:[#allocation2] sm:$0xff] %vm241, %v240
    // Predicated region
    $region14: #{tpu_custom_call.1} parent=1 // pred_check
      %p243 = pneg %p23
    $region15: #{tpu_custom_call.1} parent=1 // pred_check_branch
      %245 = sbr.rel (%p243) target = $region17
    $region16: #{tpu_custom_call.1} parent=1 // pred_region
      %v246 = vld [vmem:[#allocation2] sm:$0xff]
      %v247 = vadd.f32 %v246, 5.12e-06
      %249 = vset.pattern.permute.xlu0 3
      %250 = vperm.xlu0 %249, %v247
      %v251 = vpop.permute.xlu0 %250
      %v253 = vrcp.pop %v251
      %v254 = vmul.f32 %v251, %v253
      %v255 = vsub.f32 1.0, %v254
      %v256 = vmul.f32 %v253, %v255
      %v257 = vadd.f32 %v253, %v256
      %vm258 = vweird.f32 %v251
      %vm259 = vweird.f32 %v253
      %vm260 = vmor %vm258, %vm259
      %v261 = vsel %vm260, %v253, %v257
      %v262 = vand.u32 2147483647, %v251
      %vm263 = vcmp.eq.f32.partialorder %v262, 8.507059e+37
      %v264 = vand.u32 %v251, 2147483648
      %v265 = vor.u32 1.1754944e-38, %v264
      %v266 = vsel %vm263, %v265, %v261
      %v267 = vmul.f32 %v246, %v266
      %vm268 = vcmask 23552
      %269 = vst.msk [vmem:[%s1] sm:$0xff] %vm268, %v267
    $region17: #{tpu_custom_call.1} parent=1 // pred_fallthru
      _
    // Predicated region
    $region18: #{tpu_custom_call.1} parent=1 // pred_check
      _
    $region19: #{tpu_custom_call.1} parent=1 // pred_check_branch
      %271 = sbr.rel (0) target = $region21
    $region20: #{tpu_custom_call.1} parent=1 // pred_region
      _
    $region21: #{tpu_custom_call.1} parent=1 // pred_fallthru
      _
    // Predicated region
    $region22: #{tpu_custom_call.1} parent=1 // pred_check
      _
    $region23: #{tpu_custom_call.1} parent=1 // pred_check_branch
      %273 = sbr.rel (0) target = $region25
    $region24: #{tpu_custom_call.1} parent=1 // pred_region
      _
    $region25: #{tpu_custom_call.1} parent=1 // pred_fallthru
      _
    %274 = vsyncpa [#allocation4], 1

</llo_original>
